<compile_context>
chip_gen: v5e
topology: v5e:2x2
jax: 0.10.0
libtpu: 0.0.40
codegen_flags: <defaults>
</compile_context>

<pallas_src>
import functools

import jax
import jax.numpy as jnp
from jax import lax
from jax.experimental import pallas as pl
from jax.experimental.pallas import tpu as pltpu

VERY_SMALL_NUMBER = 1e-12
_MM_DTYPE = jnp.bfloat16     # MXU operand / inter-pass carry dtype (f32 accumulation)


def _round_up(x, m):
    return (x + m - 1) // m * m


# --------------------------------------------------------------------------
# Capability probe: single-buffered resident BlockSpecs (pl.Buffered(1))
# --------------------------------------------------------------------------
def _probe_kernel(x_ref, o_ref):
    o_ref[...] = x_ref[...] + 1.0


@functools.lru_cache(maxsize=None)
def _single_buffer_residents_supported():
    """Check once whether pipeline_mode=pl.Buffered(1) compiles & runs here."""
    try:
        spec = pl.BlockSpec((8, 128), lambda i: (0, 0),
                            pipeline_mode=pl.Buffered(buffer_count=1))
        fn = pl.pallas_call(
            _probe_kernel,
            grid=(2,),
            in_specs=[spec],
            out_specs=pl.BlockSpec((8, 128), lambda i: (0, 0)),
            out_shape=jax.ShapeDtypeStruct((8, 128), jnp.float32))
        jax.block_until_ready(fn(jnp.zeros((8, 128), jnp.float32)))
        return True
    except Exception:
        return False


def _resident_spec(block_shape, index_map):
    """BlockSpec for a grid-invariant operand: one VMEM buffer, no double buffer."""
    if _single_buffer_residents_supported():
        return pl.BlockSpec(block_shape, index_map,
                            pipeline_mode=pl.Buffered(buffer_count=1))
    return pl.BlockSpec(block_shape, index_map)


# --------------------------------------------------------------------------
# Trace-time VMEM budget & row-tile selection
# --------------------------------------------------------------------------
def _vmem_limit_bytes():
    """3/4 of this chip's VMEM (v7x: 64 MiB, v5e/v6e: 128 MiB); safe fallback 48 MiB."""
    cap = None
    try:
        cap = int(getattr(pltpu.get_tpu_info(), "vmem_capacity_bytes", 0)) or None
    except Exception:
        cap = None
    if cap is None:
        cap = 64 * 1024 * 1024            # conservative (v7x-sized) assumption
    limit = (cap // 4) * 3
    return max(16 * 1024 * 1024, min(limit, 128 * 1024 * 1024))


def _pass1_vmem_bytes(tm, n_pad, pd, hp, emit_intermediates):
    resident = 2 * n_pad * pd * 2 + n_pad * hp * 2 + hp * 4           # Xn hi+lo, XW1, b1
    out_bufs = 2 * (tm * n_pad * 2) + 2 * (tm * hp * 2)               # adj(bf16), h(bf16) dbl buf
    if emit_intermediates:
        out_bufs += 2 * (tm * n_pad * 4) * 2                          # raw f32 + adj f32
    temps = 4 * tm * n_pad * 4 + 2 * tm * hp * 4                      # f32 raw/adj temps + slack
    return resident + out_bufs + temps


def _pass2_vmem_bytes(tm, n_pad, hp, op):
    resident = n_pad * hp * 2 + hp * op * 4 + op * 4                  # h, W2, b2
    bufs = 2 * (tm * n_pad * 2) + 2 * (tm * op * 4)                   # adj tile in, out tile
    temps = tm * hp * 4 + 2 * tm * op * 4
    return resident + bufs + temps


def _choose_row_tile(n, pd, hp, op, vmem_limit, emit_intermediates, block_rows=None):
    n16 = _round_up(max(n, 16), 16)
    budget = int(vmem_limit * 0.85)
    tm = 16
    for cand in (2048, 1024, 768, 512, 384, 256, 128, 64, 48, 32, 16):
        if cand > n16:
            continue
        n_pad_c = _round_up(n, cand)
        if (_pass1_vmem_bytes(cand, n_pad_c, pd, hp, emit_intermediates) <= budget
                and _pass2_vmem_bytes(cand, n_pad_c, hp, op) <= budget):
            tm = cand
            break
    if block_rows is not None:
        tm = min(tm, max(16, _round_up(int(block_rows), 16)))
    n_pad = _round_up(n, tm)
    # TODO(synk): for N large enough that the resident Xn / h no longer fit the
    # budget (N >~ 6-8k on v7x), add a second "arbitrary" grid axis that K-tiles
    # the cosine contraction / column-tiles adj with a VMEM accumulator.
    return tm, n_pad


# --------------------------------------------------------------------------
# Pass 0 (row-tiled, parallel): Xn hi/lo bf16 split + emb @ W1 (bf16)
#   Xn = concat_p [ normalize(emb * w_p) / sqrt(P) ]   (1/P of mean folded in)
# --------------------------------------------------------------------------
def _prep_kernel(num_pers, feat_dim, emb_ref, wt_ref, w1_ref,
                 xn_hi_ref, xn_lo_ref, xw1_ref):
    emb = emb_ref[...]                                   # [TM, D] f32
    wt = wt_ref[...]                                     # [P, D]  f32
    inv_sqrt_p = 1.0 / float(num_pers) ** 0.5
    lane_aligned = (feat_dim % 128 == 0)
    hi_cols, lo_cols = [], []
    for p_idx in range(num_pers):                        # static & tiny -> unrolled (VPU/EUP)
        xw = emb * wt[p_idx, :][None, :]
        ss = jnp.sum(xw * xw, axis=-1, keepdims=True)
        # F.normalize(p=2, eps=1e-12): x * rsqrt(max(||x||^2, eps^2))   (EUP rsqrt)
        xn = xw * (lax.rsqrt(jnp.maximum(ss, VERY_SMALL_NUMBER * VERY_SMALL_NUMBER))
                   * inv_sqrt_p)
        hi = xn.astype(_MM_DTYPE)
        lo = (xn - hi.astype(jnp.float32)).astype(_MM_DTYPE)      # bf16 hi+lo split
        if lane_aligned:
            sl = slice(p_idx * feat_dim, (p_idx + 1) * feat_dim)  # direct lane-aligned store
            xn_hi_ref[:, sl] = hi
            xn_lo_ref[:, sl] = lo
        else:
            hi_cols.append(hi)
            lo_cols.append(lo)
    if not lane_aligned:
        xn_hi_ref[...] = jnp.concatenate(hi_cols, axis=-1)
        xn_lo_ref[...] = jnp.concatenate(lo_cols, axis=-1)
    xw1_ref[...] = jnp.dot(emb.astype(_MM_DTYPE), w1_ref[...].astype(_MM_DTYPE),
                           preferred_element_type=jnp.float32).astype(_MM_DTYPE)


# --------------------------------------------------------------------------
# Pass 1 (row-tiled, parallel): adjacency rows + GCN hop 1 rows
# --------------------------------------------------------------------------
def _adj_layer1_body(tm, xn_hi_ref, xn_lo_ref, xw1_ref, b1_ref):
    row0 = pl.multiple_of(pl.program_id(0) * tm, tm)
    hi_t = xn_hi_ref[pl.ds(row0, tm), :]                 # [TM, P*D] bf16 (sliced off resident)
    lo_t = xn_lo_ref[pl.ds(row0, tm), :]
    hi_f = xn_hi_ref[...]                                # [N,  P*D] bf16
    lo_f = xn_lo_ref[...]

    # Fused weighted cosine: one K = P*D contraction per split term; contracting
    # ((1,),(1,)) is the canonical q @ k^T flash-attention idiom (transpose is
    # absorbed in the MXU operand feed, no materialized Xn^T).  lo@lo (~2^-18
    # relative) is dropped.
    dn = (((1,), (1,)), ((), ()))
    raw = lax.dot_general(hi_t, hi_f, dn, preferred_element_type=jnp.float32)
    raw = raw + lax.dot_general(hi_t, lo_f, dn, preferred_element_type=jnp.float32)
    raw = raw + lax.dot_general(lo_t, hi_f, dn, preferred_element_type=jnp.float32)

    # adj = raw / clamp(row_sum, 1e-12): exact reciprocal (one divide per row).
    row_sum = jnp.sum(raw, axis=-1, keepdims=True)
    adj = raw * (1.0 / jnp.maximum(row_sum, VERY_SMALL_NUMBER))
    adj_bf = adj.astype(_MM_DTYPE)

    # TODO(synk): F.dropout on raw_adj / adj / node_vec is identity here (eval
    # mode); training-mode stochastic dropout not implemented.

    # GCN hop 1: h = relu(adj @ (emb @ W1) + b1), bf16 operands / f32 accumulate.
    h = jnp.dot(adj_bf, xw1_ref[...], preferred_element_type=jnp.float32)
    h = jnp.maximum(h + b1_ref[...], 0.0)
    return raw, adj, adj_bf, h


def _make_adj_layer1_kernel(tm, emit_intermediates):
    if emit_intermediates:
        def kernel(xn_hi_ref, xn_lo_ref, xw1_ref, b1_ref,
                   raw_ref, adj_f32_ref, adj_ref, h_ref):
            raw, adj, adj_bf, h = _adj_layer1_body(tm, xn_hi_ref, xn_lo_ref,
                                                   xw1_ref, b1_ref)
            raw_ref[...] = raw
            adj_f32_ref[...] = adj
            adj_ref[...] = adj_bf
            h_ref[...] = h.astype(_MM_DTYPE)
    else:
        def kernel(xn_hi_ref, xn_lo_ref, xw1_ref, b1_ref, adj_ref, h_ref):
            _, _, adj_bf, h = _adj_layer1_body(tm, xn_hi_ref, xn_lo_ref,
                                               xw1_ref, b1_ref)
            adj_ref[...] = adj_bf
            h_ref[...] = h.astype(_MM_DTYPE)
    return kernel


# --------------------------------------------------------------------------
# Pass 2 (row-tiled, parallel): GCN hop 2 rows + masked log_softmax
# --------------------------------------------------------------------------
def _layer2_kernel(out_dim, adj_ref, h_ref, w2_ref, b2_ref, out_ref):
    t = jnp.dot(adj_ref[...], h_ref[...], preferred_element_type=jnp.float32)   # [TM, Hp]
    o = jnp.dot(t.astype(_MM_DTYPE), w2_ref[...].astype(_MM_DTYPE),
                preferred_element_type=jnp.float32) + b2_ref[...]               # [TM, Op]
    # log_softmax over the first `out_dim` valid lanes; padded lanes written as 0.
    valid = lax.broadcasted_iota(jnp.int32, o.shape, 1) < out_dim
    m = jnp.max(jnp.where(valid, o, -jnp.inf), axis=-1, keepdims=True)
    z = o - m
    se = jnp.sum(jnp.where(valid, jnp.exp(z), 0.0), axis=-1, keepdims=True)
    out_ref[...] = jnp.where(valid, z - jnp.log(se), 0.0)


# --------------------------------------------------------------------------
# Wrapper
# --------------------------------------------------------------------------
def graph_fusion_forward(stru_embeds, mm_embeds, params, *,
                         block_rows=None, return_intermediates=False):
    """Fused forward.  params: weight_tensor [P,D], w1 [D,H], b1 [H], w2 [H,O], b2 [O].

    Default: returns log_softmax output only (no raw_adj/adj writeback — the
    torch module's forward returns None).  With return_intermediates=True,
    returns (raw_adj, adj, out) with raw_adj/adj in f32 for verification.
    """
    emb = jnp.concatenate([stru_embeds, mm_embeds], axis=0).astype(jnp.float32)
    wt = params["weight_tensor"].astype(jnp.float32)
    w1 = params["w1"].astype(jnp.float32)
    b1 = params["b1"].astype(jnp.float32)
    w2 = params["w2"].astype(jnp.float32)
    b2 = params["b2"].astype(jnp.float32)

    n, d = emb.shape
    p = wt.shape[0]
    h_dim = w1.shape[1]
    o_dim = w2.shape[1]
    pd = p * d

    # Lane-dense zero padding of the GCN feature dims (zero weights -> identical math).
    hp = _round_up(h_dim, 128)
    op = _round_up(o_dim, 128)
    w1p = jnp.pad(w1, ((0, 0), (0, hp - h_dim)))
    b1p = jnp.pad(b1, (0, hp - h_dim)).reshape(1, hp)
    w2p = jnp.pad(w2, ((0, hp - h_dim), (0, op - o_dim)))
    b2p = jnp.pad(b2, (0, op - o_dim)).reshape(1, op)

    vmem_limit = _vmem_limit_bytes()
    tm, n_pad = _choose_row_tile(n, pd, hp, op, vmem_limit,
                                 return_intermediates, block_rows)
    if n_pad != n:
        # Padded node rows are mathematically zero after normalization, so their
        # adjacency rows/cols vanish; they are sliced off below.
        emb = jnp.pad(emb, ((0, n_pad - n), (0, 0)))
    num_tiles = n_pad // tm
    bf16 = _MM_DTYPE
    f32 = jnp.float32
    cparams = pltpu.CompilerParams(dimension_semantics=("parallel",),
                                   vmem_limit_bytes=vmem_limit)

    # ---- pass 0: bf16 hi/lo split of Xn + emb @ W1 (row-tiled) -------------
    xn_hi, xn_lo, xw1 = pl.pallas_call(
        functools.partial(_prep_kernel, p, d),
        grid=(num_tiles,),
        in_specs=[pl.BlockSpec((tm, d), lambda i: (i, 0)),
                  _resident_spec((p, d), lambda i: (0, 0)),
                  _resident_spec((d, hp), lambda i: (0, 0))],
        out_specs=[pl.BlockSpec((tm, pd), lambda i: (i, 0)),
                   pl.BlockSpec((tm, pd), lambda i: (i, 0)),
                   pl.BlockSpec((tm, hp), lambda i: (i, 0))],
        out_shape=[jax.ShapeDtypeStruct((n_pad, pd), bf16),
                   jax.ShapeDtypeStruct((n_pad, pd), bf16),
                   jax.ShapeDtypeStruct((n_pad, hp), bf16)],
        compiler_params=cparams,
        cost_estimate=pl.CostEstimate(
            flops=int(2 * n_pad * d * hp + 8 * n_pad * pd),
            transcendentals=int(n_pad * p),
            bytes_accessed=int(4 * n_pad * d + 4 * p * d + 4 * d * hp
                               + 2 * (2 * n_pad * pd + n_pad * hp))),
    )(emb, wt, w1p)

    # ---- pass 1: adjacency rows (bf16 carry) + GCN hop 1 rows ---------------
    if return_intermediates:
        extra_specs = [pl.BlockSpec((tm, n_pad), lambda i: (i, 0)),
                       pl.BlockSpec((tm, n_pad), lambda i: (i, 0))]
        extra_shapes = [jax.ShapeDtypeStruct((n_pad, n_pad), f32),
                        jax.ShapeDtypeStruct((n_pad, n_pad), f32)]
    else:
        extra_specs, extra_shapes = [], []

    pass1 = pl.pallas_call(
        _make_adj_layer1_kernel(tm, return_intermediates),
        grid=(num_tiles,),
        in_specs=[_resident_spec((n_pad, pd), lambda i: (0, 0)),    # Xn hi (resident)
                  _resident_spec((n_pad, pd), lambda i: (0, 0)),    # Xn lo (resident)
                  _resident_spec((n_pad, hp), lambda i: (0, 0)),    # emb @ W1 (resident)
                  _resident_spec((1, hp), lambda i: (0, 0))],       # b1
        out_specs=extra_specs
                  + [pl.BlockSpec((tm, n_pad), lambda i: (i, 0)),   # adj (bf16 carry)
                     pl.BlockSpec((tm, hp), lambda i: (i, 0))],     # h   (bf16 carry)
        out_shape=extra_shapes
                  + [jax.ShapeDtypeStruct((n_pad, n_pad), bf16),
                     jax.ShapeDtypeStruct((n_pad, hp), bf16)],
        compiler_params=cparams,
        cost_estimate=pl.CostEstimate(
            flops=int(2 * n_pad * n_pad * (3 * pd + hp) + 4 * n_pad * n_pad),
            transcendentals=int(n_pad),
            bytes_accessed=int(2 * (2 * n_pad * pd + n_pad * hp)
                               + 2 * n_pad * n_pad + 2 * n_pad * hp
                               + (8 * n_pad * n_pad if return_intermediates else 0))),
    )(xn_hi, xn_lo, xw1, b1p)

    if return_intermediates:
        raw_adj, adj_f32, adj_bf, h = pass1
    else:
        adj_bf, h = pass1

    # ---- pass 2: GCN hop 2 rows + masked log_softmax ------------------------
    out_p = pl.pallas_call(
        functools.partial(_layer2_kernel, o_dim),
        grid=(num_tiles,),
        in_specs=[pl.BlockSpec((tm, n_pad), lambda i: (i, 0)),      # adj row tile (bf16)
                  _resident_spec((n_pad, hp), lambda i: (0, 0)),    # h (bf16, resident)
                  _resident_spec((hp, op), lambda i: (0, 0)),       # W2 (padded)
                  _resident_spec((1, op), lambda i: (0, 0))],       # b2 (padded)
        out_specs=pl.BlockSpec((tm, op), lambda i: (i, 0)),
        out_shape=jax.ShapeDtypeStruct((n_pad, op), f32),
        compiler_params=cparams,
        cost_estimate=pl.CostEstimate(
            flops=int(2 * n_pad * n_pad * hp + 2 * n_pad * hp * op),
            transcendentals=int(n_pad * op),
            bytes_accessed=int(2 * n_pad * n_pad + 2 * n_pad * hp
                               + 4 * hp * op + 4 * n_pad * op)),
    )(adj_bf, h, w2p, b2p)

    out = out_p[:n, :o_dim]
    if return_intermediates:
        return raw_adj[:n, :n], adj_f32[:n, :n], out
    return out


# --------------------------------------------------------------------------
# Pure-JAX reference of the same math (correctness check)
# --------------------------------------------------------------------------
def _reference_forward(stru_embeds, mm_embeds, params):
    emb = jnp.concatenate([stru_embeds, mm_embeds], axis=0).astype(jnp.float32)
    wt = params["weight_tensor"].astype(jnp.float32)
    xw = emb[None, :, :] * wt[:, None, :]                       # [P, N, D]
    norm = jnp.linalg.norm(xw, axis=-1, keepdims=True)
    xw_n = xw / jnp.maximum(norm, VERY_SMALL_NUMBER)
    raw_adj = jnp.einsum("pnd,pmd->nm", xw_n, xw_n) / wt.shape[0]
    adj = raw_adj / jnp.maximum(jnp.sum(raw_adj, -1, keepdims=True), VERY_SMALL_NUMBER)
    h = jax.nn.relu(adj @ (emb @ params["w1"]) + params["b1"][None, :])
    o = adj @ (h @ params["w2"]) + params["b2"][None, :]
    return raw_adj, adj, jax.nn.log_softmax(o, axis=-1)


if __name__ == "__main__":
    # Small shapes consistent with the module: nums nodes per modality -> N = 2*nums.
    nums = 32
    input_dim = 32
    gnn_nhid = 32
    gnn_ofeat = 16
    num_pers = 4

    key = jax.random.PRNGKey(0)
    k1, k2, k3, k4, k5 = jax.random.split(key, 5)

    # Non-negative embeddings (as produced by upstream ReLU encoders) so the
    # weighted-cosine raw_adj is non-negative, matching the module's own
    # `assert raw_adj.min() >= 0` and keeping the row normalization well posed.
    stru_embeds = jax.random.uniform(k1, (nums, input_dim), jnp.float32, 0.05, 1.0)
    mm_embeds = jax.random.uniform(k2, (nums, input_dim), jnp.float32, 0.05, 1.0)

    # Deterministic synthetic parameter init mirroring param_init()
    # (kaiming-normal-like weights, zero biases).
    params = {
        "weight_tensor": jax.random.uniform(k3, (num_pers, input_dim), jnp.float32,
                                            -1.0, 1.0),
        "w1": jax.random.normal(k4, (input_dim, gnn_nhid), jnp.float32)
              * (2.0 / input_dim) ** 0.5,
        "b1": jnp.zeros((gnn_nhid,), jnp.float32),
        "w2": jax.random.normal(k5, (gnn_nhid, gnn_ofeat), jnp.float32)
              * (2.0 / gnn_nhid) ** 0.5,
        "b2": jnp.zeros((gnn_ofeat,), jnp.float32),
    }

    # Fast path (what production would run): no raw_adj / f32-adj writeback.
    # block_rows=32 forces 2 row tiles at N=64 so the parallel grids are exercised.
    out_fast = graph_fusion_forward(stru_embeds, mm_embeds, params, block_rows=32)
    jax.block_until_ready(out_fast)

    # Verification path: also emit raw_adj / adj and compare everything.
    raw_adj, adj, out = graph_fusion_forward(stru_embeds, mm_embeds, params,
                                             block_rows=32, return_intermediates=True)
    jax.block_until_ready((raw_adj, adj, out))

    r_raw, r_adj, r_out = _reference_forward(stru_embeds, mm_embeds, params)

    # bf16 hi+lo split keeps raw_adj / adj ~f32-accurate; the GCN path uses bf16
    # MXU operands (f32 accumulate) -> looser tolerance on the log_softmax output.
    assert jnp.allclose(raw_adj, r_raw, atol=3e-4, rtol=3e-4), \
        float(jnp.max(jnp.abs(raw_adj - r_raw)))
    assert jnp.allclose(adj, r_adj, atol=1e-3, rtol=1e-3), \
        float(jnp.max(jnp.abs(adj - r_adj)))
    assert jnp.allclose(out, r_out, atol=5e-2, rtol=5e-2), \
        float(jnp.max(jnp.abs(out - r_out)))
    assert jnp.allclose(out_fast, r_out, atol=5e-2, rtol=5e-2)
    assert bool(jnp.all(jnp.isfinite(out)))

    print("KERNEL_OK")
</pallas_src>

<mosaic_0001>
module attributes {stable_mosaic.version = 11 : i64} {
  func.func @_probe_kernel(%arg0: i32, %arg1: memref<8x128xf32, #tpu.memory_space<vmem>>, %arg2: memref<8x128xf32, #tpu.memory_space<vmem>>) attributes {dimension_semantics = [#tpu.dimension_semantics<arbitrary>], iteration_bounds = array<i64: 2>, scalar_prefetch = 0 : i64, scratch_operands = 0 : i64, tpu.core_type = #tpu.core_type<tc>, window_params = [{pipeline_mode = #tpu.pipeline_mode<synchronous>, transform_indices = @transform_0, window_bounds = array<i64: 8, 128>}, {pipeline_mode = #tpu.pipeline_mode<synchronous>, transform_indices = @transform_1, window_bounds = array<i64: 8, 128>}]} {
    %c0 = arith.constant 0 : index
    %c0_0 = arith.constant 0 : index
    %0 = vector.load %arg1[%c0, %c0_0] : memref<8x128xf32, #tpu.memory_space<vmem>>, vector<8x128xf32>
    %cst = arith.constant 1.000000e+00 : f32
    %1 = vector.broadcast %cst : f32 to vector<8x128xf32>
    %2 = arith.addf %0, %1 : vector<8x128xf32>
    %c0_1 = arith.constant 0 : index
    %c0_2 = arith.constant 0 : index
    %3 = vector.load %arg2[%c0_1, %c0_2] : memref<8x128xf32, #tpu.memory_space<vmem>>, vector<8x128xf32>
    tpu.vector_store %arg2[%c0_1, %c0_2], %2 {strides = array<i32>} : memref<8x128xf32, #tpu.memory_space<vmem>>, vector<8x128xf32>,
    return
  }
  func.func @transform_0(%arg0: i32) -> (i32, i32) {
    %c0_i32 = arith.constant 0 : i32
    %c0_i32_0 = arith.constant 0 : i32
    %c0_i32_1 = arith.constant 0 : i32
    return %c0_i32, %c0_i32_0 : i32, i32
  }
  func.func @transform_1(%arg0: i32) -> (i32, i32) {
    %c0_i32 = arith.constant 0 : i32
    %c0_i32_0 = arith.constant 0 : i32
    %c0_i32_1 = arith.constant 0 : i32
    return %c0_i32, %c0_i32_0 : i32, i32
  }
}

module attributes {stable_mosaic.version = 11 : i64} {
  func.func @_prep_kernel(%arg0: i32, %arg1: memref<32x32xf32, #tpu.memory_space<vmem>>, %arg2: memref<4x32xf32, #tpu.memory_space<vmem>>, %arg3: memref<32x128xf32, #tpu.memory_space<vmem>>, %arg4: memref<32x128xbf16, #tpu.memory_space<vmem>>, %arg5: memref<32x128xbf16, #tpu.memory_space<vmem>>, %arg6: memref<32x128xbf16, #tpu.memory_space<vmem>>) attributes {dimension_semantics = [#tpu.dimension_semantics<parallel>], iteration_bounds = array<i64: 2>, scalar_prefetch = 0 : i64, scratch_operands = 0 : i64, tpu.core_type = #tpu.core_type<tc>, window_params = [{transform_indices = @transform_0, window_bounds = array<i64: 32, 32>}, {pipeline_mode = #tpu.pipeline_mode<synchronous>, transform_indices = @transform_1, window_bounds = array<i64: 4, 32>}, {pipeline_mode = #tpu.pipeline_mode<synchronous>, transform_indices = @transform_2, window_bounds = array<i64: 32, 128>}, {transform_indices = @transform_3, window_bounds = array<i64: 32, 128>}, {transform_indices = @transform_4, window_bounds = array<i64: 32, 128>}, {transform_indices = @transform_5, window_bounds = array<i64: 32, 128>}]} {
    %c0 = arith.constant 0 : index
    %c0_0 = arith.constant 0 : index
    %0 = vector.load %arg1[%c0, %c0_0] : memref<32x32xf32, #tpu.memory_space<vmem>>, vector<32x32xf32>
    %c0_1 = arith.constant 0 : index
    %c0_2 = arith.constant 0 : index
    %1 = vector.load %arg2[%c0_1, %c0_2] : memref<4x32xf32, #tpu.memory_space<vmem>>, vector<4x32xf32>
    %2 = vector.extract_strided_slice %1 {offsets = [0, 0], sizes = [1, 32], strides = [1, 1]} : vector<4x32xf32> to vector<1x32xf32>
    %3 = vector.shape_cast %2 : vector<1x32xf32> to vector<32xf32>
    %4 = vector.shape_cast %3 : vector<32xf32> to vector<1x32xf32>
    %5 = vector.broadcast %4 : vector<1x32xf32> to vector<32x32xf32>
    %6 = arith.mulf %0, %5 : vector<32x32xf32>
    %7 = arith.mulf %6, %6 : vector<32x32xf32>
    %cst = arith.constant dense<0.000000e+00> : vector<32xf32>
    %8 = vector.multi_reduction <add>, %7, %cst [1] : vector<32x32xf32> to vector<32xf32>
    %9 = vector.shape_cast %8 : vector<32xf32> to vector<32x1xf32>
    %cst_3 = arith.constant 1.000000e-24 : f32
    %10 = vector.broadcast %cst_3 : f32 to vector<32x1xf32>
    %11 = arith.maximumf %9, %10 : vector<32x1xf32>
    %12 = math.rsqrt %11 : vector<32x1xf32>
    %cst_4 = arith.constant 5.000000e-01 : f32
    %13 = vector.broadcast %cst_4 : f32 to vector<32x1xf32>
    %14 = arith.mulf %12, %13 : vector<32x1xf32>
    %15 = vector.broadcast %14 : vector<32x1xf32> to vector<32x32xf32>
    %16 = arith.mulf %6, %15 : vector<32x32xf32>
    %17 = arith.truncf %16 : vector<32x32xf32> to vector<32x32xbf16>
    %18 = arith.extf %17 : vector<32x32xbf16> to vector<32x32xf32>
    %19 = arith.subf %16, %18 : vector<32x32xf32>
    %20 = arith.truncf %19 : vector<32x32xf32> to vector<32x32xbf16>
    %21 = vector.extract_strided_slice %1 {offsets = [1, 0], sizes = [1, 32], strides = [1, 1]} : vector<4x32xf32> to vector<1x32xf32>
    %22 = vector.shape_cast %21 : vector<1x32xf32> to vector<32xf32>
    %23 = vector.shape_cast %22 : vector<32xf32> to vector<1x32xf32>
    %24 = vector.broadcast %23 : vector<1x32xf32> to vector<32x32xf32>
    %25 = arith.mulf %0, %24 : vector<32x32xf32>
    %26 = arith.mulf %25, %25 : vector<32x32xf32>
    %cst_5 = arith.constant dense<0.000000e+00> : vector<32xf32>
    %27 = vector.multi_reduction <add>, %26, %cst_5 [1] : vector<32x32xf32> to vector<32xf32>
    %28 = vector.shape_cast %27 : vector<32xf32> to vector<32x1xf32>
    %cst_6 = arith.constant 1.000000e-24 : f32
    %29 = vector.broadcast %cst_6 : f32 to vector<32x1xf32>
    %30 = arith.maximumf %28, %29 : vector<32x1xf32>
    %31 = math.rsqrt %30 : vector<32x1xf32>
    %cst_7 = arith.constant 5.000000e-01 : f32
    %32 = vector.broadcast %cst_7 : f32 to vector<32x1xf32>
    %33 = arith.mulf %31, %32 : vector<32x1xf32>
    %34 = vector.broadcast %33 : vector<32x1xf32> to vector<32x32xf32>
    %35 = arith.mulf %25, %34 : vector<32x32xf32>
    %36 = arith.truncf %35 : vector<32x32xf32> to vector<32x32xbf16>
    %37 = arith.extf %36 : vector<32x32xbf16> to vector<32x32xf32>
    %38 = arith.subf %35, %37 : vector<32x32xf32>
    %39 = arith.truncf %38 : vector<32x32xf32> to vector<32x32xbf16>
    %40 = vector.extract_strided_slice %1 {offsets = [2, 0], sizes = [1, 32], strides = [1, 1]} : vector<4x32xf32> to vector<1x32xf32>
    %41 = vector.shape_cast %40 : vector<1x32xf32> to vector<32xf32>
    %42 = vector.shape_cast %41 : vector<32xf32> to vector<1x32xf32>
    %43 = vector.broadcast %42 : vector<1x32xf32> to vector<32x32xf32>
    %44 = arith.mulf %0, %43 : vector<32x32xf32>
    %45 = arith.mulf %44, %44 : vector<32x32xf32>
    %cst_8 = arith.constant dense<0.000000e+00> : vector<32xf32>
    %46 = vector.multi_reduction <add>, %45, %cst_8 [1] : vector<32x32xf32> to vector<32xf32>
    %47 = vector.shape_cast %46 : vector<32xf32> to vector<32x1xf32>
    %cst_9 = arith.constant 1.000000e-24 : f32
    %48 = vector.broadcast %cst_9 : f32 to vector<32x1xf32>
    %49 = arith.maximumf %47, %48 : vector<32x1xf32>
    %50 = math.rsqrt %49 : vector<32x1xf32>
    %cst_10 = arith.constant 5.000000e-01 : f32
    %51 = vector.broadcast %cst_10 : f32 to vector<32x1xf32>
    %52 = arith.mulf %50, %51 : vector<32x1xf32>
    %53 = vector.broadcast %52 : vector<32x1xf32> to vector<32x32xf32>
    %54 = arith.mulf %44, %53 : vector<32x32xf32>
    %55 = arith.truncf %54 : vector<32x32xf32> to vector<32x32xbf16>
    %56 = arith.extf %55 : vector<32x32xbf16> to vector<32x32xf32>
    %57 = arith.subf %54, %56 : vector<32x32xf32>
    %58 = arith.truncf %57 : vector<32x32xf32> to vector<32x32xbf16>
    %59 = vector.extract_strided_slice %1 {offsets = [3, 0], sizes = [1, 32], strides = [1, 1]} : vector<4x32xf32> to vector<1x32xf32>
    %60 = vector.shape_cast %59 : vector<1x32xf32> to vector<32xf32>
    %61 = vector.shape_cast %60 : vector<32xf32> to vector<1x32xf32>
    %62 = vector.broadcast %61 : vector<1x32xf32> to vector<32x32xf32>
    %63 = arith.mulf %0, %62 : vector<32x32xf32>
    %64 = arith.mulf %63, %63 : vector<32x32xf32>
    %cst_11 = arith.constant dense<0.000000e+00> : vector<32xf32>
    %65 = vector.multi_reduction <add>, %64, %cst_11 [1] : vector<32x32xf32> to vector<32xf32>
    %66 = vector.shape_cast %65 : vector<32xf32> to vector<32x1xf32>
    %cst_12 = arith.constant 1.000000e-24 : f32
    %67 = vector.broadcast %cst_12 : f32 to vector<32x1xf32>
    %68 = arith.maximumf %66, %67 : vector<32x1xf32>
    %69 = math.rsqrt %68 : vector<32x1xf32>
    %cst_13 = arith.constant 5.000000e-01 : f32
    %70 = vector.broadcast %cst_13 : f32 to vector<32x1xf32>
    %71 = arith.mulf %69, %70 : vector<32x1xf32>
    %72 = vector.broadcast %71 : vector<32x1xf32> to vector<32x32xf32>
    %73 = arith.mulf %63, %72 : vector<32x32xf32>
    %74 = arith.truncf %73 : vector<32x32xf32> to vector<32x32xbf16>
    %75 = arith.extf %74 : vector<32x32xbf16> to vector<32x32xf32>
    %76 = arith.subf %73, %75 : vector<32x32xf32>
    %77 = arith.truncf %76 : vector<32x32xf32> to vector<32x32xbf16>
    %78 = tpu.concatenate %17, %36, %55, %74 in 1 : vector<32x32xbf16>, vector<32x32xbf16>, vector<32x32xbf16>, vector<32x32xbf16> -> vector<32x128xbf16>
    %c0_14 = arith.constant 0 : index
    %c0_15 = arith.constant 0 : index
    %79 = vector.load %arg4[%c0_14, %c0_15] : memref<32x128xbf16, #tpu.memory_space<vmem>>, vector<32x128xbf16>
    tpu.vector_store %arg4[%c0_14, %c0_15], %78 {strides = array<i32>} : memref<32x128xbf16, #tpu.memory_space<vmem>>, vector<32x128xbf16>,
    %80 = tpu.concatenate %20, %39, %58, %77 in 1 : vector<32x32xbf16>, vector<32x32xbf16>, vector<32x32xbf16>, vector<32x32xbf16> -> vector<32x128xbf16>
    %c0_16 = arith.constant 0 : index
    %c0_17 = arith.constant 0 : index
    %81 = vector.load %arg5[%c0_16, %c0_17] : memref<32x128xbf16, #tpu.memory_space<vmem>>, vector<32x128xbf16>
    tpu.vector_store %arg5[%c0_16, %c0_17], %80 {strides = array<i32>} : memref<32x128xbf16, #tpu.memory_space<vmem>>, vector<32x128xbf16>,
    %82 = arith.truncf %0 : vector<32x32xf32> to vector<32x32xbf16>
    %c0_18 = arith.constant 0 : index
    %c0_19 = arith.constant 0 : index
    %83 = vector.load %arg3[%c0_18, %c0_19] : memref<32x128xf32, #tpu.memory_space<vmem>>, vector<32x128xf32>
    %84 = arith.truncf %83 : vector<32x128xf32> to vector<32x128xbf16>
    %cst_20 = arith.constant dense<0.000000e+00> : vector<32x128xf32>
    %85 = tpu.matmul %82, %84, %cst_20 {dimension_numbers = #tpu.dot_dimension_numbers<[1], [0], [0], [1], [0, 0, 1, 1], [], []>} : vector<32x32xbf16>, vector<32x128xbf16>, vector<32x128xf32> -> vector<32x128xf32>
    %86 = arith.truncf %85 : vector<32x128xf32> to vector<32x128xbf16>
    %c0_21 = arith.constant 0 : index
    %c0_22 = arith.constant 0 : index
    %87 = vector.load %arg6[%c0_21, %c0_22] : memref<32x128xbf16, #tpu.memory_space<vmem>>, vector<32x128xbf16>
    tpu.vector_store %arg6[%c0_21, %c0_22], %86 {strides = array<i32>} : memref<32x128xbf16, #tpu.memory_space<vmem>>, vector<32x128xbf16>,
    return
  }
  func.func @transform_0(%arg0: i32) -> (i32, i32) {
    %c0_i32 = arith.constant 0 : i32
    %c0_i32_0 = arith.constant 0 : i32
    return %arg0, %c0_i32 : i32, i32
  }
  func.func @transform_1(%arg0: i32) -> (i32, i32) {
    %c0_i32 = arith.constant 0 : i32
    %c0_i32_0 = arith.constant 0 : i32
    %c0_i32_1 = arith.constant 0 : i32
    return %c0_i32, %c0_i32_0 : i32, i32
  }
  func.func @transform_2(%arg0: i32) -> (i32, i32) {
    %c0_i32 = arith.constant 0 : i32
    %c0_i32_0 = arith.constant 0 : i32
    %c0_i32_1 = arith.constant 0 : i32
    return %c0_i32, %c0_i32_0 : i32, i32
  }
  func.func @transform_3(%arg0: i32) -> (i32, i32) {
    %c0_i32 = arith.constant 0 : i32
    %c0_i32_0 = arith.constant 0 : i32
    return %arg0, %c0_i32 : i32, i32
  }
  func.func @transform_4(%arg0: i32) -> (i32, i32) {
    %c0_i32 = arith.constant 0 : i32
    %c0_i32_0 = arith.constant 0 : i32
    return %arg0, %c0_i32 : i32, i32
  }
  func.func @transform_5(%arg0: i32) -> (i32, i32) {
    %c0_i32 = arith.constant 0 : i32
    %c0_i32_0 = arith.constant 0 : i32
    return %arg0, %c0_i32 : i32, i32
  }
}

</mosaic_0001>

<llo_original>
// kernel: tpu_custom_call.1
$region0: #{tpu_custom_call.1}
  #allocation0 [shape = 'u32[]', space=smem, size = 0x4, offset = 0x4, fixed_abs, tag = 'smem constant byte address 0x4 - core index']
  #allocation1 [shape = 'u32[72,128]{1,0:T(1,128)}', space=vmem, size = 0x9000, scoped, tag = 'internal scratch']
  %s0 = inlined_call_operand.hbm [shape: f32[8,128], index: 0, kind: input, shape index: {}]
  %s1 = inlined_call_operand.hbm [shape: f32[8,128], index: 1, kind: output, shape index: {}]
  %s2 = sld [smem:[#allocation0]]
  $region41: #{tpu_custom_call.1} parent=0
    _
  %s4 = ssub.s32 1, %s2
  %s5 = scalar_select 0, %s4, %s2
  $region1: #{tpu_custom_call.1} parent=0
    #allocation2 [shape = 'u8[4096]{0}', space=vmem, size = 0x1000, scoped, tag = 'input window, operand 0, single buffered']
    #allocation3 [shape = 's32[2]{0}', space=sflag, size = 0x8, scoped, tag = 'scoped memory for tpu_custom_call.1']
    #allocation4 [shape = 's32[2]{0}', space=sflag, size = 0x8, scoped, tag = 'scoped memory for tpu_custom_call.1']
    #allocation5 [shape = 'u8[4096]{0}', space=vmem, size = 0x1000, scoped, tag = 'output window, operand 0, single buffered']
    %6 = vsyncpa [#allocation3], 0
    %7 = vsyncpa [#allocation4], 0
    loop: start=0, step=1, limit=4
    $region2: #{tpu_custom_call.1} parent=1 // loop_pre_header
      _
    $region3: #{tpu_custom_call.1} parent=1 // loop_header
      %s9 = sphi 0, %s13
      %p10 = scmp.ge.s32.totalorder %s9, 4
      %s17 = sphi 0, %s17
      %s19 = sphi 0, %s17
      %s20 = sphi 0, %s19
      %s34 = sphi 0, %s20
      %s38 = sphi 0, %s38
      %s40 = sphi 0, %s38
      %s41 = sphi 0, %s40
      %s55 = sphi 0, %s41
    $region4: #{tpu_custom_call.1} parent=1 // loop_header_branch
      %12 = sbr.rel (%p10) target = $region8
    $region5: #{tpu_custom_call.1} parent=1 // loop_body
      %s14 = ssub.s32 %s9, 1
      %s15 = ssub.s32 %s9, 2
      %s16 = sadd.s32 %s9, 1
      %s18 = sadd.s32 %s17, 1
      %p21 = scmp.eq.s32.totalorder %s9, 1
      %p22 = scmp.ne.s32.totalorder %s17, %s19
      %p23 = scmp.eq.s32.totalorder %s9, 0
      %p24 = por %p22, %p23
      %p25 = scmp.ne.s32.totalorder %s17, %s19
      %p26 = scmp.eq.s32.totalorder %s14, 1
      %p27 = por %p25, %p26
      %p28 = scmp.ne.s32.totalorder %s19, %s20
      %p29 = scmp.eq.s32.totalorder %s14, 0
      %p30 = por %p28, %p29
      %p31 = scmp.ne.s32.totalorder %s19, %s20
      %p32 = scmp.eq.s32.totalorder %s15, 1
      %p33 = por %p31, %p32
      %p35 = scmp.ne.s32.totalorder %s20, %s34
      %p36 = scmp.eq.s32.totalorder %s15, 0
      %p37 = por %p35, %p36
      %s39 = sadd.s32 %s38, 1
      %p42 = scmp.eq.s32.totalorder %s9, 1
      %p43 = scmp.ne.s32.totalorder %s38, %s40
      %p44 = scmp.eq.s32.totalorder %s9, 0
      %p45 = por %p43, %p44
      %p46 = scmp.ne.s32.totalorder %s38, %s40
      %p47 = scmp.eq.s32.totalorder %s14, 1
      %p48 = por %p46, %p47
      %p49 = scmp.ne.s32.totalorder %s40, %s41
      %p50 = scmp.eq.s32.totalorder %s14, 0
      %p51 = por %p49, %p50
      %p52 = scmp.ne.s32.totalorder %s40, %s41
      %p53 = scmp.eq.s32.totalorder %s15, 1
      %p54 = por %p52, %p53
      %p56 = scmp.ne.s32.totalorder %s41, %s55
      %p57 = scmp.eq.s32.totalorder %s15, 0
      %p58 = por %p56, %p57
      %p59 = scmp.le.s32.totalorder 1, %s9
      %p60 = scmp.lt.s32.totalorder %s9, 3
      %p61 = pnand %p59, %p60
      %p62 = pneg %p61
      // Predicated region
      $region9: #{tpu_custom_call.1} parent=5 // pred_check
        _
      $region10: #{tpu_custom_call.1} parent=5 // pred_check_branch
        %64 = sbr.rel (%p61) target = $region12
      $region11: #{tpu_custom_call.1} parent=5 // pred_region
        %s65 = ssub.s32 %s9, 1
        // Predicated region
        $region13: #{tpu_custom_call.1} parent=11 // pred_check
          %p66 = pneg %p30
        $region14: #{tpu_custom_call.1} parent=11 // pred_check_branch
          %68 = sbr.rel (%p66) target = $region16
        $region15: #{tpu_custom_call.1} parent=11 // pred_region
          %70 = vsyncadd [#allocation3], 0
          %s72 = sshll.u32 %s0, 4
          %s73 = int_to_ptr.hbm [resolvable:$true] %s72
          %s74 = sshll.u32 [#allocation2], 4
          %s75 = int_to_ptr.vmem [resolvable:$true] %s74
          %77 = dma.hbm_to_vmem [thread:$0]  %s73, 128, %s75, [#allocation3]
        $region16: #{tpu_custom_call.1} parent=11 // pred_fallthru
          _
      $region12: #{tpu_custom_call.1} parent=5 // pred_fallthru
        _
      %p78 = scmp.lt.s32.totalorder %s9, 2
      // Predicated region
      $region17: #{tpu_custom_call.1} parent=5 // pred_check
        %p79 = pneg %p78
      $region18: #{tpu_custom_call.1} parent=5 // pred_check_branch
        %81 = sbr.rel (%p79) target = $region20
      $region19: #{tpu_custom_call.1} parent=5 // pred_region
        _
      $region20: #{tpu_custom_call.1} parent=5 // pred_fallthru
        _
      %p82 = scmp.le.s32.totalorder 1, %s9
      %p83 = scmp.lt.s32.totalorder %s9, 3
      %p84 = pnand %p82, %p83
      %p85 = pneg %p84
      // Predicated region
      $region21: #{tpu_custom_call.1} parent=5 // pred_check
        _
      $region22: #{tpu_custom_call.1} parent=5 // pred_check_branch
        %87 = sbr.rel (%p84) target = $region24
      $region23: #{tpu_custom_call.1} parent=5 // pred_region
        %s88 = ssub.s32 %s9, 1
        // Predicated region
        $region25: #{tpu_custom_call.1} parent=23 // pred_check
          %p89 = pneg %p30
        $region26: #{tpu_custom_call.1} parent=23 // pred_check_branch
          %91 = sbr.rel (%p89) target = $region28
        $region27: #{tpu_custom_call.1} parent=23 // pred_region
          %93 = dma.done [#allocation3], 128
        $region28: #{tpu_custom_call.1} parent=23 // pred_fallthru
          _
        %p94 = pneg %p30
        %p95 = pneg %p27
        %p96 = pneg %p51
        %p97 = pneg %p48
        %v98 = vld [vmem:[#allocation2] sm:$0xff]
        %v99 = vadd.f32 %v98, 1.0
        %100 = vst [vmem:[#allocation5] sm:$0xff] %v99
        // Predicated region
        $region29: #{tpu_custom_call.1} parent=23 // pred_check
          %p101 = pneg %p48
        $region30: #{tpu_custom_call.1} parent=23 // pred_check_branch
          %103 = sbr.rel (%p101) target = $region32
        $region31: #{tpu_custom_call.1} parent=23 // pred_region
          %105 = vsyncadd [#allocation4], 0
          %s107 = sshll.u32 [#allocation5], 4
          %s108 = int_to_ptr.vmem [resolvable:$true] %s107
          %s109 = sshll.u32 %s1, 4
          %s110 = int_to_ptr.hbm [resolvable:$true] %s109
          %112 = dma.vmem_to_hbm [thread:$0]  %s108, 128, %s110, [#allocation4]
        $region32: #{tpu_custom_call.1} parent=23 // pred_fallthru
          _
        // Predicated region
        $region33: #{tpu_custom_call.1} parent=23 // pred_check
          %p113 = pneg %p48
        $region34: #{tpu_custom_call.1} parent=23 // pred_check_branch
          %115 = sbr.rel (%p113) target = $region36
        $region35: #{tpu_custom_call.1} parent=23 // pred_region
          %117 = dma.done [#allocation4], 128
        $region36: #{tpu_custom_call.1} parent=23 // pred_fallthru
          _
      $region24: #{tpu_custom_call.1} parent=5 // pred_fallthru
        _
      %p118 = scmp.le.s32.totalorder 2, %s9
      // Predicated region
      $region37: #{tpu_custom_call.1} parent=5 // pred_check
        %p119 = pneg %p118
      $region38: #{tpu_custom_call.1} parent=5 // pred_check_branch
        %121 = sbr.rel (%p119) target = $region40
      $region39: #{tpu_custom_call.1} parent=5 // pred_region
        %s122 = ssub.s32 %s9, 2
      $region40: #{tpu_custom_call.1} parent=5 // pred_fallthru
        _
    $region6: #{tpu_custom_call.1} parent=1 // loop_footer
      %s13 = sadd.s32 1, %s9
    $region7: #{tpu_custom_call.1} parent=1 // loop_footer_branch
      %8 = sbr.rel target = $region3
    $region8: #{tpu_custom_call.1} parent=1 // loop_exit
      _
    %123 = vsyncpa [#allocation3], 1
    %s124 = scalar_lea.sflag [#allocation3], 1
    %125 = vsyncpa %s124, 1
    %126 = vsyncpa [#allocation4], 1
    %s127 = scalar_lea.sflag [#allocation4], 1
    %128 = vsyncpa %s127, 1

// kernel: tpu_custom_call.1
$region0: #{tpu_custom_call.1}
  #allocation0 [shape = 'u32[]', space=smem, size = 0x4, offset = 0x4, fixed_abs, tag = 'smem constant byte address 0x4 - core index']
  #allocation1 [shape = 'u32[72,128]{1,0:T(1,128)}', space=vmem, size = 0x9000, scoped, tag = 'internal scratch']
  %s0 = inlined_call_operand.vmem [shape: f32[64,32], index: 0, kind: input, shape index: {}]
  %s1 = inlined_call_operand.vmem [shape: f32[4,32], index: 1, kind: input, shape index: {}]
  %s2 = inlined_call_operand.vmem [shape: f32[32,128], index: 2, kind: input, shape index: {}]
  %s3 = inlined_call_operand.hbm [shape: bf16[64,128], index: 3, kind: output, shape index: {0}]
  %s4 = inlined_call_operand.hbm [shape: bf16[64,128], index: 4, kind: output, shape index: {1}]
  %s5 = inlined_call_operand.hbm [shape: bf16[64,128], index: 5, kind: output, shape index: {2}]
  %6 = xla_tuple %s3, %s4, %s5
  %s7 = sld [smem:[#allocation0]]
  $region61: #{tpu_custom_call.1} parent=0
    _
  %s9 = ssub.s32 1, %s7
  %s10 = scalar_select 0, %s9, %s7
  $region1: #{tpu_custom_call.1} parent=0
    #allocation2 [shape = 'u8[16384]{0}', space=vmem, size = 0x4000, scoped, tag = 'output window, operand 0']
    #allocation3 [shape = 's32[2]{0}', space=sflag, size = 0x8, scoped, tag = 'scoped memory for tpu_custom_call.1']
    #allocation4 [shape = 'u8[16384]{0}', space=vmem, size = 0x4000, scoped, tag = 'output window, operand 1']
    #allocation5 [shape = 's32[2]{0}', space=sflag, size = 0x8, scoped, tag = 'scoped memory for tpu_custom_call.1']
    #allocation6 [shape = 'u8[16384]{0}', space=vmem, size = 0x4000, scoped, tag = 'output window, operand 2']
    %11 = vsyncpa [#allocation3], 0
    %s12 = scalar_lea.sflag [#allocation3], 1
    %13 = vsyncpa %s12, 0
    %14 = vsyncpa [#allocation5], 0
    %s15 = scalar_lea.sflag [#allocation5], 1
    %16 = vsyncpa %s15, 0
    loop: start=0, step=1, limit=4
    $region2: #{tpu_custom_call.1} parent=1 // loop_pre_header
      _
    $region3: #{tpu_custom_call.1} parent=1 // loop_header
      %s18 = sphi 0, %s22
      %p19 = scmp.ge.s32.totalorder %s18, 4
      %s28 = sphi 0, %s30
      %s31 = sphi 0, %s28
      %s32 = sphi 0, %s31
      %s48 = sphi 0, %s32
      %s52 = sphi 0, %s52
      %s54 = sphi 0, %s52
      %s55 = sphi 0, %s54
      %s69 = sphi 0, %s55
      %s73 = sphi 0, %s73
      %s75 = sphi 0, %s73
      %s76 = sphi 0, %s75
      %s90 = sphi 0, %s76
      %s96 = sphi 0, %s98
      %s99 = sphi 0, %s96
      %s100 = sphi 0, %s99
      %s116 = sphi 0, %s100
      %s122 = sphi 0, %s124
      %s125 = sphi 0, %s122
      %s126 = sphi 0, %s125
      %s142 = sphi 0, %s126
      %s148 = sphi 0, %s150
      %s151 = sphi 0, %s148
      %s152 = sphi 0, %s151
      %s168 = sphi 0, %s152
    $region4: #{tpu_custom_call.1} parent=1 // loop_header_branch
      %21 = sbr.rel (%p19) target = $region8
    $region5: #{tpu_custom_call.1} parent=1 // loop_body
      %s23 = ssub.s32 %s18, 1
      %s24 = ssub.s32 %s18, 2
      %s25 = sadd.s32 %s18, 1
      %s26 = ssub.s32 %s18, %s25
      %p27 = scmp.eq.s32.totalorder %s26, 0
      %s29 = sadd.s32 %s28, 1
      %s30 = scalar_select %p27, %s28, %s29
      %p33 = pneg %p27
      %p34 = scmp.eq.s32.totalorder %s18, 1
      %p35 = por %p33, %p34
      %p36 = scmp.ne.s32.totalorder %s28, %s31
      %p37 = scmp.eq.s32.totalorder %s18, 0
      %p38 = por %p36, %p37
      %p39 = scmp.ne.s32.totalorder %s28, %s31
      %p40 = scmp.eq.s32.totalorder %s23, 1
      %p41 = por %p39, %p40
      %p42 = scmp.ne.s32.totalorder %s31, %s32
      %p43 = scmp.eq.s32.totalorder %s23, 0
      %p44 = por %p42, %p43
      %p45 = scmp.ne.s32.totalorder %s31, %s32
      %p46 = scmp.eq.s32.totalorder %s24, 1
      %p47 = por %p45, %p46
      %p49 = scmp.ne.s32.totalorder %s32, %s48
      %p50 = scmp.eq.s32.totalorder %s24, 0
      %p51 = por %p49, %p50
      %s53 = sadd.s32 %s52, 1
      %p56 = scmp.eq.s32.totalorder %s18, 1
      %p57 = scmp.ne.s32.totalorder %s52, %s54
      %p58 = scmp.eq.s32.totalorder %s18, 0
      %p59 = por %p57, %p58
      %p60 = scmp.ne.s32.totalorder %s52, %s54
      %p61 = scmp.eq.s32.totalorder %s23, 1
      %p62 = por %p60, %p61
      %p63 = scmp.ne.s32.totalorder %s54, %s55
      %p64 = scmp.eq.s32.totalorder %s23, 0
      %p65 = por %p63, %p64
      %p66 = scmp.ne.s32.totalorder %s54, %s55
      %p67 = scmp.eq.s32.totalorder %s24, 1
      %p68 = por %p66, %p67
      %p70 = scmp.ne.s32.totalorder %s55, %s69
      %p71 = scmp.eq.s32.totalorder %s24, 0
      %p72 = por %p70, %p71
      %s74 = sadd.s32 %s73, 1
      %p77 = scmp.eq.s32.totalorder %s18, 1
      %p78 = scmp.ne.s32.totalorder %s73, %s75
      %p79 = scmp.eq.s32.totalorder %s18, 0
      %p80 = por %p78, %p79
      %p81 = scmp.ne.s32.totalorder %s73, %s75
      %p82 = scmp.eq.s32.totalorder %s23, 1
      %p83 = por %p81, %p82
      %p84 = scmp.ne.s32.totalorder %s75, %s76
      %p85 = scmp.eq.s32.totalorder %s23, 0
      %p86 = por %p84, %p85
      %p87 = scmp.ne.s32.totalorder %s75, %s76
      %p88 = scmp.eq.s32.totalorder %s24, 1
      %p89 = por %p87, %p88
      %p91 = scmp.ne.s32.totalorder %s76, %s90
      %p92 = scmp.eq.s32.totalorder %s24, 0
      %p93 = por %p91, %p92
      %s94 = ssub.s32 %s18, %s25
      %p95 = scmp.eq.s32.totalorder %s94, 0
      %s97 = sadd.s32 %s96, 1
      %s98 = scalar_select %p95, %s96, %s97
      %p101 = pneg %p95
      %p102 = scmp.eq.s32.totalorder %s18, 1
      %p103 = por %p101, %p102
      %p104 = scmp.ne.s32.totalorder %s96, %s99
      %p105 = scmp.eq.s32.totalorder %s18, 0
      %p106 = por %p104, %p105
      %p107 = scmp.ne.s32.totalorder %s96, %s99
      %p108 = scmp.eq.s32.totalorder %s23, 1
      %p109 = por %p107, %p108
      %p110 = scmp.ne.s32.totalorder %s99, %s100
      %p111 = scmp.eq.s32.totalorder %s23, 0
      %p112 = por %p110, %p111
      %p113 = scmp.ne.s32.totalorder %s99, %s100
      %p114 = scmp.eq.s32.totalorder %s24, 1
      %p115 = por %p113, %p114
      %p117 = scmp.ne.s32.totalorder %s100, %s116
      %p118 = scmp.eq.s32.totalorder %s24, 0
      %p119 = por %p117, %p118
      %s120 = ssub.s32 %s18, %s25
      %p121 = scmp.eq.s32.totalorder %s120, 0
      %s123 = sadd.s32 %s122, 1
      %s124 = scalar_select %p121, %s122, %s123
      %p127 = pneg %p121
      %p128 = scmp.eq.s32.totalorder %s18, 1
      %p129 = por %p127, %p128
      %p130 = scmp.ne.s32.totalorder %s122, %s125
      %p131 = scmp.eq.s32.totalorder %s18, 0
      %p132 = por %p130, %p131
      %p133 = scmp.ne.s32.totalorder %s122, %s125
      %p134 = scmp.eq.s32.totalorder %s23, 1
      %p135 = por %p133, %p134
      %p136 = scmp.ne.s32.totalorder %s125, %s126
      %p137 = scmp.eq.s32.totalorder %s23, 0
      %p138 = por %p136, %p137
      %p139 = scmp.ne.s32.totalorder %s125, %s126
      %p140 = scmp.eq.s32.totalorder %s24, 1
      %p141 = por %p139, %p140
      %p143 = scmp.ne.s32.totalorder %s126, %s142
      %p144 = scmp.eq.s32.totalorder %s24, 0
      %p145 = por %p143, %p144
      %s146 = ssub.s32 %s18, %s25
      %p147 = scmp.eq.s32.totalorder %s146, 0
      %s149 = sadd.s32 %s148, 1
      %s150 = scalar_select %p147, %s148, %s149
      %p153 = pneg %p147
      %p154 = scmp.eq.s32.totalorder %s18, 1
      %p155 = por %p153, %p154
      %p156 = scmp.ne.s32.totalorder %s148, %s151
      %p157 = scmp.eq.s32.totalorder %s18, 0
      %p158 = por %p156, %p157
      %p159 = scmp.ne.s32.totalorder %s148, %s151
      %p160 = scmp.eq.s32.totalorder %s23, 1
      %p161 = por %p159, %p160
      %p162 = scmp.ne.s32.totalorder %s151, %s152
      %p163 = scmp.eq.s32.totalorder %s23, 0
      %p164 = por %p162, %p163
      %p165 = scmp.ne.s32.totalorder %s151, %s152
      %p166 = scmp.eq.s32.totalorder %s24, 1
      %p167 = por %p165, %p166
      %p169 = scmp.ne.s32.totalorder %s152, %s168
      %p170 = scmp.eq.s32.totalorder %s24, 0
      %p171 = por %p169, %p170
      %p172 = scmp.le.s32.totalorder 1, %s18
      %p173 = scmp.lt.s32.totalorder %s18, 3
      %p174 = pnand %p172, %p173
      %p175 = pneg %p174
      // Predicated region
      $region9: #{tpu_custom_call.1} parent=5 // pred_check
        _
      $region10: #{tpu_custom_call.1} parent=5 // pred_check_branch
        %177 = sbr.rel (%p174) target = $region12
      $region11: #{tpu_custom_call.1} parent=5 // pred_region
        %s178 = ssub.s32 %s18, 1
        // Predicated region
        $region13: #{tpu_custom_call.1} parent=11 // pred_check
          %p179 = pneg %p65
        $region14: #{tpu_custom_call.1} parent=11 // pred_check_branch
          %181 = sbr.rel (%p179) target = $region16
        $region15: #{tpu_custom_call.1} parent=11 // pred_region
          _
        $region16: #{tpu_custom_call.1} parent=11 // pred_fallthru
          _
        // Predicated region
        $region17: #{tpu_custom_call.1} parent=11 // pred_check
          %p182 = pneg %p86
        $region18: #{tpu_custom_call.1} parent=11 // pred_check_branch
          %184 = sbr.rel (%p182) target = $region20
        $region19: #{tpu_custom_call.1} parent=11 // pred_region
          _
        $region20: #{tpu_custom_call.1} parent=11 // pred_fallthru
          _
      $region12: #{tpu_custom_call.1} parent=5 // pred_fallthru
        _
      %p185 = scmp.lt.s32.totalorder %s18, 2
      // Predicated region
      $region21: #{tpu_custom_call.1} parent=5 // pred_check
        %p186 = pneg %p185
      $region22: #{tpu_custom_call.1} parent=5 // pred_check_branch
        %188 = sbr.rel (%p186) target = $region24
      $region23: #{tpu_custom_call.1} parent=5 // pred_region
        // Predicated region
        $region25: #{tpu_custom_call.1} parent=23 // pred_check
          %p189 = pneg %p38
        $region26: #{tpu_custom_call.1} parent=23 // pred_check_branch
          %191 = sbr.rel (%p189) target = $region28
        $region27: #{tpu_custom_call.1} parent=23 // pred_region
          %s192 = smul.u32 4, %s18
          %p193 = scmp.lt.s32.totalorder %s192, 7
          %s194 = scalar_select %p193, %s192, 7
          %s195 = smul.addr %s194, 8
          %s196 = scalar_lea.vmem %s0, %s195
          %s197 = smul.u32 4, %s18
        $region28: #{tpu_custom_call.1} parent=23 // pred_fallthru
          _
      $region24: #{tpu_custom_call.1} parent=5 // pred_fallthru
        _
      %p198 = scmp.le.s32.totalorder 1, %s18
      %p199 = scmp.lt.s32.totalorder %s18, 3
      %p200 = pnand %p198, %p199
      %p201 = pneg %p200
      // Predicated region
      $region29: #{tpu_custom_call.1} parent=5 // pred_check
        _
      $region30: #{tpu_custom_call.1} parent=5 // pred_check_branch
        %203 = sbr.rel (%p200) target = $region32
      $region31: #{tpu_custom_call.1} parent=5 // pred_region
        %s204 = ssub.s32 %s18, 1
        %s205 = smul.u32 4, %s23
        %p206 = scmp.lt.s32.totalorder %s205, 7
        %s207 = scalar_select %p206, %s205, 7
        %s208 = smul.addr %s207, 8
        %s209 = scalar_lea.vmem %s0, %s208
        %p210 = pneg %p44
        %p211 = pneg %p41
        %p212 = pneg %p65
        %p213 = pneg %p62
        %p214 = pneg %p86
        %p215 = pneg %p83
        %p216 = pneg %p112
        %p217 = pneg %p109
        %s218 = sand.u32 %s99, 1
        %s219 = scalar_lea.sflag [#allocation3], %s218
        %s220 = sand.u32 %s99, 1
        %s221 = smul.addr %s220, 16
        %s222 = scalar_lea.vmem [#allocation2], %s221
        %p223 = pneg %p138
        %p224 = pneg %p135
        %s225 = sand.u32 %s23, 1
        %s226 = scalar_lea.sflag [#allocation5], %s225
        %s227 = sand.u32 %s125, 1
        %s228 = smul.addr %s227, 16
        %s229 = scalar_lea.vmem [#allocation4], %s228
        %p230 = pneg %p164
        %p231 = pneg %p161
        %s232 = sand.u32 %s23, 1
        %s233 = scalar_lea.sflag [#allocation5], %s232
        %s234 = sand.u32 %s151, 1
        %s235 = smul.addr %s234, 16
        %s236 = scalar_lea.vmem [#allocation6], %s235
        %s237 = smul.u32 4, %s23
        %p238 = scmp.lt.s32.totalorder %s237, 7
        %s239 = scalar_select %p238, %s237, 7
        %s240 = smul.addr %s239, 8
        %s241 = scalar_lea.vmem %s0, %s240
        %s242 = smul.u32 4, %s23
        %s243 = smul.u32 4, %s23
        %s244 = smul.u32 4, %s23
        %s245 = smul.u32 4, %s23
        %v247 = vld [vmem:[%s241] sm:$0xff]
        %v248 = vld [vmem:[%s241 + $0x8] sm:$0xff]
        %v249 = vld [vmem:[%s241 + $0x10] sm:$0xff]
        %v250 = vld [vmem:[%s241 + $0x18] sm:$0xff]
        %v251 = vld [vmem:[%s1] sm:$0xf]
        %v252 = vperm.slane %v251, 0
        %v253 = vmul.f32 %v247, %v252
        %v254 = vmul.f32 %v248, %v252
        %v255 = vmul.f32 %v249, %v252
        %v256 = vmul.f32 %v250, %v252
        %v257 = vmul.f32 %v253, %v253
        %v258 = vmul.f32 %v254, %v254
        %v259 = vmul.f32 %v255, %v255
        %v260 = vmul.f32 %v256, %v256
        %vm261 = vcmask 261120
        %v262 = vsel %vm261, %v257, 0.0
        %263 = vadd.xlane.f32.xlu0 %v262
        %v264 = vpop.xlane.xlu0 %263
        %v265 = vsel %vm261, %v258, 0.0
        %266 = vadd.xlane.f32.xlu0 %v265
        %v267 = vpop.xlane.xlu0 %266
        %v268 = vsel %vm261, %v259, 0.0
        %269 = vadd.xlane.f32.xlu0 %v268
        %v270 = vpop.xlane.xlu0 %269
        %v271 = vsel %vm261, %v260, 0.0
        %272 = vadd.xlane.f32.xlu0 %v271
        %v273 = vpop.xlane.xlu0 %272
        %v274 = vmax.f32 %v264, 1e-24
        %v275 = vmax.f32 %v267, 1e-24
        %v276 = vmax.f32 %v270, 1e-24
        %v277 = vmax.f32 %v273, 1e-24
        %v278 = vrsqrt.pop %v274
        %v279 = vmul.f32 %v278, %v274
        %v280 = vmul.f32 %v279, %v278
        %v281 = vmul.f32 0.5, %v280
        %v282 = vsub.f32 1.5, %v281
        %v283 = vmul.f32 %v278, %v282
        %vm284 = vweird.f32 %v274
        %vm285 = vweird.f32 %v278
        %vm286 = vmor %vm284, %vm285
        %v287 = vsel %vm286, %v278, %v283
        %v288 = vrsqrt.pop %v275
        %v289 = vmul.f32 %v288, %v275
        %v290 = vmul.f32 %v289, %v288
        %v291 = vmul.f32 0.5, %v290
        %v292 = vsub.f32 1.5, %v291
        %v293 = vmul.f32 %v288, %v292
        %vm294 = vweird.f32 %v275
        %vm295 = vweird.f32 %v288
        %vm296 = vmor %vm294, %vm295
        %v297 = vsel %vm296, %v288, %v293
        %v298 = vrsqrt.pop %v276
        %v299 = vmul.f32 %v298, %v276
        %v300 = vmul.f32 %v299, %v298
        %v301 = vmul.f32 0.5, %v300
        %v302 = vsub.f32 1.5, %v301
        %v303 = vmul.f32 %v298, %v302
        %vm304 = vweird.f32 %v276
        %vm305 = vweird.f32 %v298
        %vm306 = vmor %vm304, %vm305
        %v307 = vsel %vm306, %v298, %v303
        %v308 = vrsqrt.pop %v277
        %v309 = vmul.f32 %v308, %v277
        %v310 = vmul.f32 %v309, %v308
        %v311 = vmul.f32 0.5, %v310
        %v312 = vsub.f32 1.5, %v311
        %v313 = vmul.f32 %v308, %v312
        %vm314 = vweird.f32 %v277
        %vm315 = vweird.f32 %v308
        %vm316 = vmor %vm314, %vm315
        %v317 = vsel %vm316, %v308, %v313
        %v318 = vmul.f32 %v287, 0.5
        %v319 = vmul.f32 %v297, 0.5
        %v320 = vmul.f32 %v307, 0.5
        %v321 = vmul.f32 %v317, 0.5
        %v322 = vmul.f32 %v253, %v318
        %v323 = vmul.f32 %v254, %v319
        %v324 = vmul.f32 %v255, %v320
        %v325 = vmul.f32 %v256, %v321
        %v326 = vpack.c.bf16 %v322, %v322
        %v327 = vpack.c.bf16 %v323, %v323
        %v328 = vpack.c.bf16 %v324, %v324
        %v329 = vpack.c.bf16 %v325, %v325
        %v330 = vunpack.c.l.bf16 %v326
        %v331 = vunpack.c.l.bf16 %v327
        %v332 = vunpack.c.l.bf16 %v328
        %v333 = vunpack.c.l.bf16 %v329
        %v334 = vsub.f32 %v322, %v330
        %v335 = vsub.f32 %v323, %v331
        %v336 = vsub.f32 %v324, %v332
        %v337 = vsub.f32 %v325, %v333
        %v338 = vpack.c.bf16 %v334, %v334
        %v339 = vpack.c.bf16 %v335, %v335
        %v340 = vpack.c.bf16 %v336, %v336
        %v341 = vpack.c.bf16 %v337, %v337
        %v342 = vperm.slane %v251, 1
        %v343 = vmul.f32 %v247, %v342
        %v344 = vmul.f32 %v248, %v342
        %v345 = vmul.f32 %v249, %v342
        %v346 = vmul.f32 %v250, %v342
        %v347 = vmul.f32 %v343, %v343
        %v348 = vmul.f32 %v344, %v344
        %v349 = vmul.f32 %v345, %v345
        %v350 = vmul.f32 %v346, %v346
        %v351 = vsel %vm261, %v347, 0.0
        %352 = vadd.xlane.f32.xlu0 %v351
        %v353 = vpop.xlane.xlu0 %352
        %v354 = vsel %vm261, %v348, 0.0
        %355 = vadd.xlane.f32.xlu0 %v354
        %v356 = vpop.xlane.xlu0 %355
        %v357 = vsel %vm261, %v349, 0.0
        %358 = vadd.xlane.f32.xlu0 %v357
        %v359 = vpop.xlane.xlu0 %358
        %v360 = vsel %vm261, %v350, 0.0
        %361 = vadd.xlane.f32.xlu0 %v360
        %v362 = vpop.xlane.xlu0 %361
        %v363 = vmax.f32 %v353, 1e-24
        %v364 = vmax.f32 %v356, 1e-24
        %v365 = vmax.f32 %v359, 1e-24
        %v366 = vmax.f32 %v362, 1e-24
        %v367 = vrsqrt.pop %v363
        %v368 = vmul.f32 %v367, %v363
        %v369 = vmul.f32 %v368, %v367
        %v370 = vmul.f32 0.5, %v369
        %v371 = vsub.f32 1.5, %v370
        %v372 = vmul.f32 %v367, %v371
        %vm373 = vweird.f32 %v363
        %vm374 = vweird.f32 %v367
        %vm375 = vmor %vm373, %vm374
        %v376 = vsel %vm375, %v367, %v372
        %v377 = vrsqrt.pop %v364
        %v378 = vmul.f32 %v377, %v364
        %v379 = vmul.f32 %v378, %v377
        %v380 = vmul.f32 0.5, %v379
        %v381 = vsub.f32 1.5, %v380
        %v382 = vmul.f32 %v377, %v381
        %vm383 = vweird.f32 %v364
        %vm384 = vweird.f32 %v377
        %vm385 = vmor %vm383, %vm384
        %v386 = vsel %vm385, %v377, %v382
        %v387 = vrsqrt.pop %v365
        %v388 = vmul.f32 %v387, %v365
        %v389 = vmul.f32 %v388, %v387
        %v390 = vmul.f32 0.5, %v389
        %v391 = vsub.f32 1.5, %v390
        %v392 = vmul.f32 %v387, %v391
        %vm393 = vweird.f32 %v365
        %vm394 = vweird.f32 %v387
        %vm395 = vmor %vm393, %vm394
        %v396 = vsel %vm395, %v387, %v392
        %v397 = vrsqrt.pop %v366
        %v398 = vmul.f32 %v397, %v366
        %v399 = vmul.f32 %v398, %v397
        %v400 = vmul.f32 0.5, %v399
        %v401 = vsub.f32 1.5, %v400
        %v402 = vmul.f32 %v397, %v401
        %vm403 = vweird.f32 %v366
        %vm404 = vweird.f32 %v397
        %vm405 = vmor %vm403, %vm404
        %v406 = vsel %vm405, %v397, %v402
        %v407 = vmul.f32 %v376, 0.5
        %v408 = vmul.f32 %v386, 0.5
        %v409 = vmul.f32 %v396, 0.5
        %v410 = vmul.f32 %v406, 0.5
        %v411 = vmul.f32 %v343, %v407
        %v412 = vmul.f32 %v344, %v408
        %v413 = vmul.f32 %v345, %v409
        %v414 = vmul.f32 %v346, %v410
        %v415 = vpack.c.bf16 %v411, %v411
        %v416 = vpack.c.bf16 %v412, %v412
        %v417 = vpack.c.bf16 %v413, %v413
        %v418 = vpack.c.bf16 %v414, %v414
        %v419 = vunpack.c.l.bf16 %v415
        %v420 = vunpack.c.l.bf16 %v416
        %v421 = vunpack.c.l.bf16 %v417
        %v422 = vunpack.c.l.bf16 %v418
        %v423 = vsub.f32 %v411, %v419
        %v424 = vsub.f32 %v412, %v420
        %v425 = vsub.f32 %v413, %v421
        %v426 = vsub.f32 %v414, %v422
        %v427 = vpack.c.bf16 %v423, %v423
        %v428 = vpack.c.bf16 %v424, %v424
        %v429 = vpack.c.bf16 %v425, %v425
        %v430 = vpack.c.bf16 %v426, %v426
        %v431 = vperm.slane %v251, 2
        %v432 = vmul.f32 %v247, %v431
        %v433 = vmul.f32 %v248, %v431
        %v434 = vmul.f32 %v249, %v431
        %v435 = vmul.f32 %v250, %v431
        %v436 = vmul.f32 %v432, %v432
        %v437 = vmul.f32 %v433, %v433
        %v438 = vmul.f32 %v434, %v434
        %v439 = vmul.f32 %v435, %v435
        %v440 = vsel %vm261, %v436, 0.0
        %441 = vadd.xlane.f32.xlu0 %v440
        %v442 = vpop.xlane.xlu0 %441
        %v443 = vsel %vm261, %v437, 0.0
        %444 = vadd.xlane.f32.xlu0 %v443
        %v445 = vpop.xlane.xlu0 %444
        %v446 = vsel %vm261, %v438, 0.0
        %447 = vadd.xlane.f32.xlu0 %v446
        %v448 = vpop.xlane.xlu0 %447
        %v449 = vsel %vm261, %v439, 0.0
        %450 = vadd.xlane.f32.xlu0 %v449
        %v451 = vpop.xlane.xlu0 %450
        %v452 = vmax.f32 %v442, 1e-24
        %v453 = vmax.f32 %v445, 1e-24
        %v454 = vmax.f32 %v448, 1e-24
        %v455 = vmax.f32 %v451, 1e-24
        %v456 = vrsqrt.pop %v452
        %v457 = vmul.f32 %v456, %v452
        %v458 = vmul.f32 %v457, %v456
        %v459 = vmul.f32 0.5, %v458
        %v460 = vsub.f32 1.5, %v459
        %v461 = vmul.f32 %v456, %v460
        %vm462 = vweird.f32 %v452
        %vm463 = vweird.f32 %v456
        %vm464 = vmor %vm462, %vm463
        %v465 = vsel %vm464, %v456, %v461
        %v466 = vrsqrt.pop %v453
        %v467 = vmul.f32 %v466, %v453
        %v468 = vmul.f32 %v467, %v466
        %v469 = vmul.f32 0.5, %v468
        %v470 = vsub.f32 1.5, %v469
        %v471 = vmul.f32 %v466, %v470
        %vm472 = vweird.f32 %v453
        %vm473 = vweird.f32 %v466
        %vm474 = vmor %vm472, %vm473
        %v475 = vsel %vm474, %v466, %v471
        %v476 = vrsqrt.pop %v454
        %v477 = vmul.f32 %v476, %v454
        %v478 = vmul.f32 %v477, %v476
        %v479 = vmul.f32 0.5, %v478
        %v480 = vsub.f32 1.5, %v479
        %v481 = vmul.f32 %v476, %v480
        %vm482 = vweird.f32 %v454
        %vm483 = vweird.f32 %v476
        %vm484 = vmor %vm482, %vm483
        %v485 = vsel %vm484, %v476, %v481
        %v486 = vrsqrt.pop %v455
        %v487 = vmul.f32 %v486, %v455
        %v488 = vmul.f32 %v487, %v486
        %v489 = vmul.f32 0.5, %v488
        %v490 = vsub.f32 1.5, %v489
        %v491 = vmul.f32 %v486, %v490
        %vm492 = vweird.f32 %v455
        %vm493 = vweird.f32 %v486
        %vm494 = vmor %vm492, %vm493
        %v495 = vsel %vm494, %v486, %v491
        %v496 = vmul.f32 %v465, 0.5
        %v497 = vmul.f32 %v475, 0.5
        %v498 = vmul.f32 %v485, 0.5
        %v499 = vmul.f32 %v495, 0.5
        %v500 = vmul.f32 %v432, %v496
        %v501 = vmul.f32 %v433, %v497
        %v502 = vmul.f32 %v434, %v498
        %v503 = vmul.f32 %v435, %v499
        %v504 = vpack.c.bf16 %v500, %v500
        %v505 = vpack.c.bf16 %v501, %v501
        %v506 = vpack.c.bf16 %v502, %v502
        %v507 = vpack.c.bf16 %v503, %v503
        %v508 = vunpack.c.l.bf16 %v504
        %v509 = vunpack.c.l.bf16 %v505
        %v510 = vunpack.c.l.bf16 %v506
        %v511 = vunpack.c.l.bf16 %v507
        %v512 = vsub.f32 %v500, %v508
        %v513 = vsub.f32 %v501, %v509
        %v514 = vsub.f32 %v502, %v510
        %v515 = vsub.f32 %v503, %v511
        %v516 = vpack.c.bf16 %v512, %v512
        %v517 = vpack.c.bf16 %v513, %v513
        %v518 = vpack.c.bf16 %v514, %v514
        %v519 = vpack.c.bf16 %v515, %v515
        %v520 = vperm.slane %v251, 3
        %v521 = vmul.f32 %v247, %v520
        %v522 = vmul.f32 %v248, %v520
        %v523 = vmul.f32 %v249, %v520
        %v524 = vmul.f32 %v250, %v520
        %v525 = vmul.f32 %v521, %v521
        %v526 = vmul.f32 %v522, %v522
        %v527 = vmul.f32 %v523, %v523
        %v528 = vmul.f32 %v524, %v524
        %v529 = vsel %vm261, %v525, 0.0
        %530 = vadd.xlane.f32.xlu0 %v529
        %v531 = vpop.xlane.xlu0 %530
        %v532 = vsel %vm261, %v526, 0.0
        %533 = vadd.xlane.f32.xlu0 %v532
        %v534 = vpop.xlane.xlu0 %533
        %v535 = vsel %vm261, %v527, 0.0
        %536 = vadd.xlane.f32.xlu0 %v535
        %v537 = vpop.xlane.xlu0 %536
        %v538 = vsel %vm261, %v528, 0.0
        %539 = vadd.xlane.f32.xlu0 %v538
        %v540 = vpop.xlane.xlu0 %539
        %v541 = vmax.f32 %v531, 1e-24
        %v542 = vmax.f32 %v534, 1e-24
        %v543 = vmax.f32 %v537, 1e-24
        %v544 = vmax.f32 %v540, 1e-24
        %v545 = vrsqrt.pop %v541
        %v546 = vmul.f32 %v545, %v541
        %v547 = vmul.f32 %v546, %v545
        %v548 = vmul.f32 0.5, %v547
        %v549 = vsub.f32 1.5, %v548
        %v550 = vmul.f32 %v545, %v549
        %vm551 = vweird.f32 %v541
        %vm552 = vweird.f32 %v545
        %vm553 = vmor %vm551, %vm552
        %v554 = vsel %vm553, %v545, %v550
        %v555 = vrsqrt.pop %v542
        %v556 = vmul.f32 %v555, %v542
        %v557 = vmul.f32 %v556, %v555
        %v558 = vmul.f32 0.5, %v557
        %v559 = vsub.f32 1.5, %v558
        %v560 = vmul.f32 %v555, %v559
        %vm561 = vweird.f32 %v542
        %vm562 = vweird.f32 %v555
        %vm563 = vmor %vm561, %vm562
        %v564 = vsel %vm563, %v555, %v560
        %v565 = vrsqrt.pop %v543
        %v566 = vmul.f32 %v565, %v543
        %v567 = vmul.f32 %v566, %v565
        %v568 = vmul.f32 0.5, %v567
        %v569 = vsub.f32 1.5, %v568
        %v570 = vmul.f32 %v565, %v569
        %vm571 = vweird.f32 %v543
        %vm572 = vweird.f32 %v565
        %vm573 = vmor %vm571, %vm572
        %v574 = vsel %vm573, %v565, %v570
        %v575 = vrsqrt.pop %v544
        %v576 = vmul.f32 %v575, %v544
        %v577 = vmul.f32 %v576, %v575
        %v578 = vmul.f32 0.5, %v577
        %v579 = vsub.f32 1.5, %v578
        %v580 = vmul.f32 %v575, %v579
        %vm581 = vweird.f32 %v544
        %vm582 = vweird.f32 %v575
        %vm583 = vmor %vm581, %vm582
        %v584 = vsel %vm583, %v575, %v580
        %v585 = vmul.f32 %v554, 0.5
        %v586 = vmul.f32 %v564, 0.5
        %v587 = vmul.f32 %v574, 0.5
        %v588 = vmul.f32 %v584, 0.5
        %v589 = vmul.f32 %v521, %v585
        %v590 = vmul.f32 %v522, %v586
        %v591 = vmul.f32 %v523, %v587
        %v592 = vmul.f32 %v524, %v588
        %v593 = vpack.c.bf16 %v589, %v589
        %v594 = vpack.c.bf16 %v590, %v590
        %v595 = vpack.c.bf16 %v591, %v591
        %v596 = vpack.c.bf16 %v592, %v592
        %v597 = vunpack.c.l.bf16 %v593
        %v598 = vunpack.c.l.bf16 %v594
        %v599 = vunpack.c.l.bf16 %v595
        %v600 = vunpack.c.l.bf16 %v596
        %v601 = vsub.f32 %v589, %v597
        %v602 = vsub.f32 %v590, %v598
        %v603 = vsub.f32 %v591, %v599
        %v604 = vsub.f32 %v592, %v600
        %v605 = vpack.c.bf16 %v601, %v601
        %v606 = vpack.c.bf16 %v602, %v602
        %v607 = vpack.c.bf16 %v603, %v603
        %v608 = vpack.c.bf16 %v604, %v604
        %v613 = vunpack.c.l.b16 %v326
        %v614 = vunpack.c.l.b16 %v327
        %v615 = vunpack.c.l.b16 %v328
        %v616 = vunpack.c.l.b16 %v329
        %v617 = vpack.c.b16 %v614, %v613
        %v618 = vpack.c.b16 %v616, %v615
        %v623 = vunpack.c.l.b16 %v415
        %v624 = vunpack.c.l.b16 %v416
        %v625 = vunpack.c.l.b16 %v417
        %v626 = vunpack.c.l.b16 %v418
        %v627 = vpack.c.b16 %v624, %v623
        %v628 = vpack.c.b16 %v626, %v625
        %629 = vrot.lane.b32.xlu0 %v627, 32
        %v630 = vpop.permute.xlu0 %629
        %631 = vrot.lane.b32.xlu0 %v628, 32
        %v632 = vpop.permute.xlu0 %631
        %v637 = vunpack.c.l.b16 %v504
        %v638 = vunpack.c.l.b16 %v505
        %v639 = vunpack.c.l.b16 %v506
        %v640 = vunpack.c.l.b16 %v507
        %v641 = vpack.c.b16 %v638, %v637
        %v642 = vpack.c.b16 %v640, %v639
        %643 = vrot.lane.b32.xlu0 %v641, 64
        %v644 = vpop.permute.xlu0 %643
        %645 = vrot.lane.b32.xlu0 %v642, 64
        %v646 = vpop.permute.xlu0 %645
        %v651 = vunpack.c.l.b16 %v593
        %v652 = vunpack.c.l.b16 %v594
        %v653 = vunpack.c.l.b16 %v595
        %v654 = vunpack.c.l.b16 %v596
        %v655 = vpack.c.b16 %v652, %v651
        %v656 = vpack.c.b16 %v654, %v653
        %657 = vrot.lane.b32.xlu0 %v655, 96
        %v658 = vpop.permute.xlu0 %657
        %659 = vrot.lane.b32.xlu0 %v656, 96
        %v660 = vpop.permute.xlu0 %659
        %v663 = vsel %vm261, %v617, %v630
        %v666 = vsel %vm261, %v618, %v632
        %vm667 = vcmask 523264
        %v669 = vsel %vm667, %v663, %v644
        %v671 = vsel %vm667, %v666, %v646
        %vm672 = vcmask 785408
        %v674 = vsel %vm672, %v669, %v658
        %v676 = vsel %vm672, %v671, %v660
        %v679 = vunpack.c.l.b16 %v674
        %v680 = vunpack.c.h.b16 %v674
        %v681 = vunpack.c.l.b16 %v676
        %v682 = vunpack.c.h.b16 %v676
        %v683 = vpack.c.b16 %v679, %v679
        %v684 = vpack.c.b16 %v680, %v680
        %v685 = vpack.c.b16 %v681, %v681
        %v686 = vpack.c.b16 %v682, %v682
        %691 = vst [vmem:[%s222] sm:$0xf] %v683
        %692 = vst [vmem:[%s222 + $0x4] sm:$0xf] %v684
        %693 = vst [vmem:[%s222 + $0x8] sm:$0xf] %v685
        %694 = vst [vmem:[%s222 + $0xc] sm:$0xf] %v686
        %v699 = vunpack.c.l.b16 %v338
        %v700 = vunpack.c.l.b16 %v339
        %v701 = vunpack.c.l.b16 %v340
        %v702 = vunpack.c.l.b16 %v341
        %v703 = vpack.c.b16 %v700, %v699
        %v704 = vpack.c.b16 %v702, %v701
        %v709 = vunpack.c.l.b16 %v427
        %v710 = vunpack.c.l.b16 %v428
        %v711 = vunpack.c.l.b16 %v429
        %v712 = vunpack.c.l.b16 %v430
        %v713 = vpack.c.b16 %v710, %v709
        %v714 = vpack.c.b16 %v712, %v711
        %715 = vrot.lane.b32.xlu0 %v713, 32
        %v716 = vpop.permute.xlu0 %715
        %717 = vrot.lane.b32.xlu0 %v714, 32
        %v718 = vpop.permute.xlu0 %717
        %v723 = vunpack.c.l.b16 %v516
        %v724 = vunpack.c.l.b16 %v517
        %v725 = vunpack.c.l.b16 %v518
        %v726 = vunpack.c.l.b16 %v519
        %v727 = vpack.c.b16 %v724, %v723
        %v728 = vpack.c.b16 %v726, %v725
        %729 = vrot.lane.b32.xlu0 %v727, 64
        %v730 = vpop.permute.xlu0 %729
        %731 = vrot.lane.b32.xlu0 %v728, 64
        %v732 = vpop.permute.xlu0 %731
        %v737 = vunpack.c.l.b16 %v605
        %v738 = vunpack.c.l.b16 %v606
        %v739 = vunpack.c.l.b16 %v607
        %v740 = vunpack.c.l.b16 %v608
        %v741 = vpack.c.b16 %v738, %v737
        %v742 = vpack.c.b16 %v740, %v739
        %743 = vrot.lane.b32.xlu0 %v741, 96
        %v744 = vpop.permute.xlu0 %743
        %745 = vrot.lane.b32.xlu0 %v742, 96
        %v746 = vpop.permute.xlu0 %745
        %v749 = vsel %vm261, %v703, %v716
        %v752 = vsel %vm261, %v704, %v718
        %v754 = vsel %vm667, %v749, %v730
        %v756 = vsel %vm667, %v752, %v732
        %v758 = vsel %vm672, %v754, %v744
        %v760 = vsel %vm672, %v756, %v746
        %v763 = vunpack.c.l.b16 %v758
        %v764 = vunpack.c.h.b16 %v758
        %v765 = vunpack.c.l.b16 %v760
        %v766 = vunpack.c.h.b16 %v760
        %v767 = vpack.c.b16 %v763, %v763
        %v768 = vpack.c.b16 %v764, %v764
        %v769 = vpack.c.b16 %v765, %v765
        %v770 = vpack.c.b16 %v766, %v766
        %775 = vst [vmem:[%s229] sm:$0xf] %v767
        %776 = vst [vmem:[%s229 + $0x4] sm:$0xf] %v768
        %777 = vst [vmem:[%s229 + $0x8] sm:$0xf] %v769
        %778 = vst [vmem:[%s229 + $0xc] sm:$0xf] %v770
        %v779 = vpack.c.bf16 %v248, %v247
        %v780 = vpack.c.bf16 %v250, %v249
        %v781 = vld [vmem:[%s2] sm:$0xff]
        %v782 = vld [vmem:[%s2 + $0x8] sm:$0xff]
        %v783 = vld [vmem:[%s2 + $0x10] sm:$0xff]
        %v784 = vld [vmem:[%s2 + $0x18] sm:$0xff]
        %v785 = vpack.c.bf16 %v782, %v781
        %v786 = vpack.c.bf16 %v784, %v783
        %v788 = vsel %vm261, %v779, 0
        %v791 = vsel %vm261, %v780, 0
        %793 = vmatpush.bf16.msra.mxu0 0
        %794 = vmatpush.bf16.msra.mxu0 0
        %795 = vmatpush.bf16.msra.mxu0 0
        %796 = vmatpush.bf16.msra.mxu0 0
        %797 = vmatpush.bf16.msra.mxu0 0
        %798 = vmatpush.bf16.msra.mxu0 0
        %799 = vmatpush.bf16.msra.mxu0 %v786
        %800 = vmatpush.bf16.msra.mxu0 %v785
        %801 = vmatmul.bf16.gmra.mxu0 %v788
        %v802 = vpop.f32.mrf.mxu0
        %v803 = vadd.f32 0.0, %v802
        %v804 = vpop.f32.mrf.mxu0
        %v805 = vadd.f32 0.0, %v804
        %806 = vmatmul.bf16.gmra.mxu0 %v791
        %v807 = vpop.f32.mrf.mxu0
        %v808 = vadd.f32 0.0, %v807
        %v809 = vpop.f32.mrf.mxu0
        %v810 = vadd.f32 0.0, %v809
        %811 = vdwg.mxu0
        %v812 = vpack.c.bf16 %v803, %v803
        %v813 = vpack.c.bf16 %v805, %v805
        %v814 = vpack.c.bf16 %v808, %v808
        %v815 = vpack.c.bf16 %v810, %v810
        %816 = vst [vmem:[%s236] sm:$0xf] %v812
        %817 = vst [vmem:[%s236 + $0x4] sm:$0xf] %v813
        %818 = vst [vmem:[%s236 + $0x8] sm:$0xf] %v814
        %819 = vst [vmem:[%s236 + $0xc] sm:$0xf] %v815
        %s820 = sand.u32 %s99, 1
        %s821 = scalar_lea.sflag [#allocation3], %s820
        %s822 = sand.u32 %s99, 1
        %s823 = smul.addr %s822, 16
        %s824 = scalar_lea.vmem [#allocation2], %s823
        %s825 = sand.u32 %s23, 1
        %s826 = scalar_lea.sflag [#allocation5], %s825
        %s827 = sand.u32 %s125, 1
        %s828 = smul.addr %s827, 16
        %s829 = scalar_lea.vmem [#allocation4], %s828
        %s830 = sand.u32 %s23, 1
        %s831 = scalar_lea.sflag [#allocation5], %s830
        %s832 = sand.u32 %s151, 1
        %s833 = smul.addr %s832, 16
        %s834 = scalar_lea.vmem [#allocation6], %s833
        // Predicated region
        $region33: #{tpu_custom_call.1} parent=31 // pred_check
          %p835 = pneg %p109
        $region34: #{tpu_custom_call.1} parent=31 // pred_check_branch
          %837 = sbr.rel (%p835) target = $region36
        $region35: #{tpu_custom_call.1} parent=31 // pred_region
          %s838 = smul.u32 4, %s23
          %840 = vsyncadd %s821, 0
          %s841 = smul.addr %s838, 4
          %s842 = scalar_lea.hbm %s3, %s841
          %s843 = sshll.u32 %s824, 4
          %s844 = int_to_ptr.vmem [resolvable:$true] %s843
          %s845 = sshll.u32 %s842, 4
          %s846 = int_to_ptr.hbm [resolvable:$true] %s845
          %851 = dma.vmem_to_hbm [thread:$0]  %s844, 256, %s846, %s821, 64, 64, 4
        $region36: #{tpu_custom_call.1} parent=31 // pred_fallthru
          _
        // Predicated region
        $region37: #{tpu_custom_call.1} parent=31 // pred_check
          %p852 = pneg %p135
        $region38: #{tpu_custom_call.1} parent=31 // pred_check_branch
          %854 = sbr.rel (%p852) target = $region40
        $region39: #{tpu_custom_call.1} parent=31 // pred_region
          %s855 = smul.u32 4, %s23
          %857 = vsyncadd %s826, 0
          %s858 = smul.addr %s855, 4
          %s859 = scalar_lea.hbm %s4, %s858
          %s860 = sshll.u32 %s829, 4
          %s861 = int_to_ptr.vmem [resolvable:$true] %s860
          %s862 = sshll.u32 %s859, 4
          %s863 = int_to_ptr.hbm [resolvable:$true] %s862
          %868 = dma.vmem_to_hbm [thread:$0]  %s861, 256, %s863, %s826, 64, 64, 4
        $region40: #{tpu_custom_call.1} parent=31 // pred_fallthru
          _
        // Predicated region
        $region41: #{tpu_custom_call.1} parent=31 // pred_check
          %p869 = pneg %p161
        $region42: #{tpu_custom_call.1} parent=31 // pred_check_branch
          %871 = sbr.rel (%p869) target = $region44
        $region43: #{tpu_custom_call.1} parent=31 // pred_region
          %s872 = smul.u32 4, %s23
          %874 = vsyncadd %s831, 0
          %s875 = smul.addr %s872, 4
          %s876 = scalar_lea.hbm %s5, %s875
          %s877 = sshll.u32 %s834, 4
          %s878 = int_to_ptr.vmem [resolvable:$true] %s877
          %s879 = sshll.u32 %s876, 4
          %s880 = int_to_ptr.hbm [resolvable:$true] %s879
          %885 = dma.vmem_to_hbm [thread:$0]  %s878, 256, %s880, %s831, 64, 64, 4
        $region44: #{tpu_custom_call.1} parent=31 // pred_fallthru
          _
      $region32: #{tpu_custom_call.1} parent=5 // pred_fallthru
        _
      %p886 = scmp.le.s32.totalorder 2, %s18
      // Predicated region
      $region45: #{tpu_custom_call.1} parent=5 // pred_check
        %p887 = pneg %p886
      $region46: #{tpu_custom_call.1} parent=5 // pred_check_branch
        %889 = sbr.rel (%p887) target = $region48
      $region47: #{tpu_custom_call.1} parent=5 // pred_region
        %s890 = ssub.s32 %s18, 2
        // Predicated region
        $region49: #{tpu_custom_call.1} parent=47 // pred_check
          %p891 = pneg %p115
        $region50: #{tpu_custom_call.1} parent=47 // pred_check_branch
          %893 = sbr.rel (%p891) target = $region52
        $region51: #{tpu_custom_call.1} parent=47 // pred_region
          %s894 = sand.u32 %s100, 1
          %s895 = scalar_lea.sflag [#allocation3], %s894
          %s896 = sand.u32 %s100, 1
          %s897 = smul.addr %s896, 16
          %s898 = scalar_lea.vmem [#allocation2], %s897
          %900 = dma.done %s895, 256
        $region52: #{tpu_custom_call.1} parent=47 // pred_fallthru
          _
        // Predicated region
        $region53: #{tpu_custom_call.1} parent=47 // pred_check
          %p901 = pneg %p141
        $region54: #{tpu_custom_call.1} parent=47 // pred_check_branch
          %903 = sbr.rel (%p901) target = $region56
        $region55: #{tpu_custom_call.1} parent=47 // pred_region
          %s904 = sand.u32 %s24, 1
          %s905 = scalar_lea.sflag [#allocation5], %s904
          %s906 = sand.u32 %s126, 1
          %s907 = smul.addr %s906, 16
          %s908 = scalar_lea.vmem [#allocation4], %s907
          %910 = dma.done %s905, 256
        $region56: #{tpu_custom_call.1} parent=47 // pred_fallthru
          _
        // Predicated region
        $region57: #{tpu_custom_call.1} parent=47 // pred_check
          %p911 = pneg %p167
        $region58: #{tpu_custom_call.1} parent=47 // pred_check_branch
          %913 = sbr.rel (%p911) target = $region60
        $region59: #{tpu_custom_call.1} parent=47 // pred_region
          %s914 = sand.u32 %s24, 1
          %s915 = scalar_lea.sflag [#allocation5], %s914
          %s916 = sand.u32 %s152, 1
          %s917 = smul.addr %s916, 16
          %s918 = scalar_lea.vmem [#allocation6], %s917
          %920 = dma.done %s915, 256
        $region60: #{tpu_custom_call.1} parent=47 // pred_fallthru
          _
      $region48: #{tpu_custom_call.1} parent=5 // pred_fallthru
        _
    $region6: #{tpu_custom_call.1} parent=1 // loop_footer
      %s22 = sadd.s32 1, %s18
    $region7: #{tpu_custom_call.1} parent=1 // loop_footer_branch
      %17 = sbr.rel target = $region3
    $region8: #{tpu_custom_call.1} parent=1 // loop_exit
      _
    %921 = vsyncpa [#allocation3], 1
    %s922 = scalar_lea.sflag [#allocation3], 1
    %923 = vsyncpa %s922, 1
    %924 = vsyncpa [#allocation5], 1
    %s925 = scalar_lea.sflag [#allocation5], 1
    %926 = vsyncpa %s925, 1

</llo_original>
